<compile_context>
chip_gen: v7x
topology: tpu7x:2x2x1
jax: 0.10.0
libtpu: 0.0.40
codegen_flags: <defaults>
</compile_context>

<pallas_src>
import jax
import jax.numpy as jnp
from jax.experimental import pallas as pl
from jax.experimental.pallas import tpu as pltpu


def normalize_kernel(mean_ref, inv_std_ref, x_ref, o_ref):
    # x_ref / o_ref: (TR, TL) tile.  mean_ref / inv_std_ref: (TR, 1) per-row
    # f32 parameters that broadcast across the lane axis (VPU only).
    x = x_ref[...]
    o_ref[...] = ((x - mean_ref[...]) * inv_std_ref[...]).astype(o_ref.dtype)


def _cdiv(a, b):
    return -(-a // b)


def _round_up(x, m):
    return _cdiv(x, m) * m


def _tpu_generation():
    """Best-effort TPU generation sniff (falls back to conservative tuning)."""
    try:
        kind = jax.devices()[0].device_kind.lower()
    except Exception:
        return 0
    if "v7" in kind or "tpu7" in kind:
        return 7
    if "v6" in kind or "tpu6" in kind:
        return 6
    if "v5" in kind or "tpu5" in kind:
        return 5
    return 0


def _tuning_for_generation(gen):
    if gen >= 7:
        # 64 MiB physical VMEM/TC, 3.2 TB/s HBM, 2 TensorCores per chip.
        return dict(target_bytes=8 << 20, vmem_limit_bytes=48 << 20, num_cores=2)
    if gen == 6:
        # 32 MiB default scoped VMEM: 4 MiB blocks double-buffered fit fine.
        return dict(target_bytes=4 << 20, vmem_limit_bytes=None, num_cores=1)
    # v5e (and unknown): 16 MiB default scoped VMEM -> smaller blocks, still
    # ~85% of HBM roofline.
    return dict(target_bytes=3 << 20, vmem_limit_bytes=None, num_cores=1)


def _choose_tiles(num_rows, num_lanes, itemsize, target_bytes, num_cores,
                  max_lane_block=32 * 1024):
    """Pick a (rows, lanes) block: lane-dense, ~target_bytes, layout-legal."""
    # Dtype-aware sublane packing: f32 -> 8 rows, bf16 -> 16, int8/fp8 -> 32.
    sub_mult = max(8, 32 // max(1, itemsize))

    # Lane (last) block dim: full extent if it fits; otherwise balance blocks
    # of a multiple of 128 that nearly evenly divide the row, so the tail tile
    # is not a tiny masked partial store.
    if num_lanes <= max_lane_block:
        tl = num_lanes                       # == full dim -> always legal
    else:
        n_lane_blocks = _cdiv(num_lanes, max_lane_block)
        tl = min(max_lane_block,
                 _round_up(_cdiv(num_lanes, n_lane_blocks), 128))

    # Row (second-minor) block dim: full extent if tiny, else sized so one
    # block moves ~target_bytes, rounded to the dtype's sublane packing.
    if num_rows <= sub_mult:
        tr = num_rows                        # == full dim -> always legal
    else:
        rows_target = max(sub_mult, target_bytes // max(1, tl * itemsize))
        tr = min(rows_target, num_rows)
        tr = max(sub_mult, (tr // sub_mult) * sub_mult)

    # Megacore: guarantee at least `num_cores` grid steps (v7x has 2 TCs) so
    # small tensors still shard across cores and pipeline DMA with compute.
    if num_cores > 1 and _cdiv(num_rows, tr) * _cdiv(num_lanes, tl) < num_cores:
        if num_rows >= num_cores * sub_mult:
            tr = _round_up(_cdiv(num_rows, num_cores), sub_mult)
        elif num_lanes >= num_cores * 128:
            tl = _round_up(_cdiv(num_lanes, num_cores), 128)
        # else: too small to split legally; leave as a single block.
    return tr, tl


def normalize_layer(x, mean, std):
    """Pallas TPU equivalent of NormalizeLayer.forward (NCHW input)."""
    B, C, H, W = x.shape
    assert mean.shape == (C,) and std.shape == (C,)

    N = B * C
    L = H * W

    # Lane-dense flatten; contiguous in NCHW so this is layout-free.
    x2 = x.reshape(N, L)

    # Per-row (= per (batch, channel)) parameters; divide folded into multiply.
    # Note: precomputed 1/std is ~1 ulp from a true divide (fine for rtol=1e-5).
    compute_dtype = jnp.float32
    mean_rows = jnp.tile(mean.astype(compute_dtype), B).reshape(N, 1)
    inv_std_rows = jnp.tile(1.0 / std.astype(compute_dtype), B).reshape(N, 1)

    cfg = _tuning_for_generation(_tpu_generation())
    itemsize = jnp.dtype(x.dtype).itemsize
    tr, tl = _choose_tiles(N, L, itemsize, cfg["target_bytes"], cfg["num_cores"])

    # Grid order: rows OUTER, lanes INNER.  The (tr, 1) mean/inv_std block
    # index (r, 0) is then constant across the inner loop, so the tiny param
    # DMAs are not re-issued per inner step.  Do not swap these axes.
    grid = (_cdiv(N, tr), _cdiv(L, tl))

    cost = pl.CostEstimate(
        flops=2 * N * L,                     # one sub + one mul per element
        transcendentals=0,
        bytes_accessed=N * L * itemsize       # read x
                       + N * L * itemsize     # write out
                       + 2 * N * 4,           # mean + inv_std (f32)
    )

    out2 = pl.pallas_call(
        normalize_kernel,
        out_shape=jax.ShapeDtypeStruct((N, L), x.dtype),
        grid=grid,
        in_specs=[
            pl.BlockSpec((tr, 1), lambda r, l: (r, 0)),    # per-row mean
            pl.BlockSpec((tr, 1), lambda r, l: (r, 0)),    # per-row 1/std
            pl.BlockSpec((tr, tl), lambda r, l: (r, l)),   # x tile
        ],
        out_specs=pl.BlockSpec((tr, tl), lambda r, l: (r, l)),
        compiler_params=pltpu.CompilerParams(
            dimension_semantics=("parallel", "parallel"),
            vmem_limit_bytes=cfg["vmem_limit_bytes"],
        ),
        cost_estimate=cost,
    )(mean_rows, inv_std_rows, x2)

    return out2.reshape(B, C, H, W)


if __name__ == "__main__":
    key = jax.random.PRNGKey(0)

    B, C, H, W = 2, 3, 16, 16          # module asserts exactly 3 channels
    x = jax.random.normal(key, (B, C, H, W), dtype=jnp.float32)

    # Deterministic "parameters" (standard ImageNet-style constants).
    mean = jnp.array([0.485, 0.456, 0.406], dtype=jnp.float32)
    std = jnp.array([0.229, 0.224, 0.225], dtype=jnp.float32)

    out = normalize_layer(x, mean, std)
    out = jax.block_until_ready(out)

    # Pure-JAX reference (same semantics as the PyTorch forward).
    ref = (x - mean[None, :, None, None]) / std[None, :, None, None]
    assert out.shape == x.shape and out.dtype == x.dtype
    assert jnp.allclose(out, ref, rtol=1e-5, atol=1e-6)

    print("KERNEL_OK")
</pallas_src>

<mosaic_0001>
module attributes {stable_mosaic.version = 11 : i64} {
  func.func @normalize_kernel(%arg0: i32, %arg1: i32, %arg2: memref<6x1xf32, #tpu.memory_space<vmem>>, %arg3: memref<6x1xf32, #tpu.memory_space<vmem>>, %arg4: memref<6x256xf32, #tpu.memory_space<vmem>>, %arg5: memref<6x256xf32, #tpu.memory_space<vmem>>) attributes {dimension_semantics = [#tpu.dimension_semantics<parallel>, #tpu.dimension_semantics<parallel>], iteration_bounds = array<i64: 1, 1>, scalar_prefetch = 0 : i64, scratch_operands = 0 : i64, tpu.core_type = #tpu.core_type<tc>, window_params = [{transform_indices = @transform_0, window_bounds = array<i64: 6, 1>}, {transform_indices = @transform_1, window_bounds = array<i64: 6, 1>}, {transform_indices = @transform_2, window_bounds = array<i64: 6, 256>}, {transform_indices = @transform_3, window_bounds = array<i64: 6, 256>}]} {
    %c0 = arith.constant 0 : index
    %c0_0 = arith.constant 0 : index
    %0 = vector.load %arg4[%c0, %c0_0] : memref<6x256xf32, #tpu.memory_space<vmem>>, vector<6x256xf32>
    %c0_1 = arith.constant 0 : index
    %c0_2 = arith.constant 0 : index
    %1 = vector.load %arg2[%c0_1, %c0_2] : memref<6x1xf32, #tpu.memory_space<vmem>>, vector<6x1xf32>
    %2 = vector.broadcast %1 : vector<6x1xf32> to vector<6x256xf32>
    %3 = arith.subf %0, %2 : vector<6x256xf32>
    %c0_3 = arith.constant 0 : index
    %c0_4 = arith.constant 0 : index
    %4 = vector.load %arg3[%c0_3, %c0_4] : memref<6x1xf32, #tpu.memory_space<vmem>>, vector<6x1xf32>
    %5 = vector.broadcast %4 : vector<6x1xf32> to vector<6x256xf32>
    %6 = arith.mulf %3, %5 : vector<6x256xf32>
    %c0_5 = arith.constant 0 : index
    %c0_6 = arith.constant 0 : index
    %7 = vector.load %arg5[%c0_5, %c0_6] : memref<6x256xf32, #tpu.memory_space<vmem>>, vector<6x256xf32>
    tpu.vector_store %arg5[%c0_5, %c0_6], %6 {strides = array<i32>} : memref<6x256xf32, #tpu.memory_space<vmem>>, vector<6x256xf32>,
    return
  }
  func.func @transform_0(%arg0: i32, %arg1: i32) -> (i32, i32) {
    %c0_i32 = arith.constant 0 : i32
    %c0_i32_0 = arith.constant 0 : i32
    return %arg0, %c0_i32 : i32, i32
  }
  func.func @transform_1(%arg0: i32, %arg1: i32) -> (i32, i32) {
    %c0_i32 = arith.constant 0 : i32
    %c0_i32_0 = arith.constant 0 : i32
    return %arg0, %c0_i32 : i32, i32
  }
  func.func @transform_2(%arg0: i32, %arg1: i32) -> (i32, i32) {
    %c0_i32 = arith.constant 0 : i32
    return %arg0, %arg1 : i32, i32
  }
  func.func @transform_3(%arg0: i32, %arg1: i32) -> (i32, i32) {
    %c0_i32 = arith.constant 0 : i32
    return %arg0, %arg1 : i32, i32
  }
}

</mosaic_0001>

<llo_original>
// kernel: tpu_custom_call.1
$region0: #{tpu_custom_call.1}
  #allocation0 [shape = 'u32[]', space=smem, size = 0x4, offset = 0x4, fixed_abs, tag = 'smem constant byte address 0x4 - core index']
  #allocation1 [shape = 'u32[144,128]{1,0:T(1,128)}', space=vmem, size = 0x12000, scoped, tag = 'internal scratch']
  %s0 = inlined_call_operand.vmem [shape: f32[6,1], index: 0, kind: input, shape index: {}]
  %s1 = inlined_call_operand.vmem [shape: f32[6,1], index: 1, kind: input, shape index: {}]
  %s2 = inlined_call_operand.vmem [shape: f32[6,256], index: 2, kind: input, shape index: {}]
  %s3 = inlined_call_operand.hbm [shape: f32[6,256], index: 3, kind: output, shape index: {}]
  %s4 = sld [smem:[#allocation0]]
  $region22: #{tpu_custom_call.1} parent=0
    _
  %s6 = ssub.s32 1, %s4
  %s7 = scalar_select 0, %s6, %s4
  $region1: #{tpu_custom_call.1} parent=0
    #allocation2 [shape = 'u8[8192]{0}', space=vmem, size = 0x2000, scoped, tag = 'output window, operand 0, single buffered']
    #allocation3 [shape = 's32[1]{0}', space=sflag, size = 0x4, scoped, tag = 'scoped memory for tpu_custom_call.1']
    %8 = vsyncpa [#allocation3], 0
    // Predicated region
    $region2: #{tpu_custom_call.1} parent=1 // pred_check
      _
    $region3: #{tpu_custom_call.1} parent=1 // pred_check_branch
      %10 = sbr.rel (0) target = $region5
    $region4: #{tpu_custom_call.1} parent=1 // pred_region
      _
    $region5: #{tpu_custom_call.1} parent=1 // pred_fallthru
      _
    // Predicated region
    $region6: #{tpu_custom_call.1} parent=1 // pred_check
      _
    $region7: #{tpu_custom_call.1} parent=1 // pred_check_branch
      %12 = sbr.rel (0) target = $region9
    $region8: #{tpu_custom_call.1} parent=1 // pred_region
      _
    $region9: #{tpu_custom_call.1} parent=1 // pred_fallthru
      _
    // Predicated region
    $region10: #{tpu_custom_call.1} parent=1 // pred_check
      _
    $region11: #{tpu_custom_call.1} parent=1 // pred_check_branch
      %14 = sbr.rel (0) target = $region13
    $region12: #{tpu_custom_call.1} parent=1 // pred_region
      _
    $region13: #{tpu_custom_call.1} parent=1 // pred_fallthru
      _
    %v15 = vld [vmem:[%s2] sm:$0x3f]
    %v16 = vld [vmem:[%s2 + $0x8] sm:$0x3f]
    %v17 = vld [vmem:[%s0] sm:$0x3f]
    %19 = vset.pattern.permute.xlu0 0
    %20 = vperm.xlu0 %19, %v17
    %v21 = vpop.permute.xlu0 %20
    %v23 = vsub.f32 %v15, %v21
    %v24 = vsub.f32 %v16, %v21
    %v25 = vld [vmem:[%s1] sm:$0x3f]
    %27 = vset.pattern.permute.xlu0 0
    %28 = vperm.xlu0 %27, %v25
    %v29 = vpop.permute.xlu0 %28
    %v31 = vmul.f32 %v23, %v29
    %v32 = vmul.f32 %v24, %v29
    %33 = vst [vmem:[#allocation2] sm:$0x3f] %v31
    %34 = vst [vmem:[#allocation2 + $0x8] sm:$0x3f] %v32
    // Predicated region
    $region14: #{tpu_custom_call.1} parent=1 // pred_check
      _
    $region15: #{tpu_custom_call.1} parent=1 // pred_check_branch
      %36 = sbr.rel (0) target = $region17
    $region16: #{tpu_custom_call.1} parent=1 // pred_region
      %s38 = ssub.s32 256, 256
      %39 = vsyncadd [#allocation3], %s38
      %s41 = sshll.u32 [#allocation2], 4
      %s42 = int_to_ptr.vmem [resolvable:$true] %s41
      %44 = dma.vmem_to_hbm [thread:$0]  %s42, 256, %s3, [#allocation3]
    $region17: #{tpu_custom_call.1} parent=1 // pred_fallthru
      _
    // Predicated region
    $region18: #{tpu_custom_call.1} parent=1 // pred_check
      _
    $region19: #{tpu_custom_call.1} parent=1 // pred_check_branch
      %46 = sbr.rel (0) target = $region21
    $region20: #{tpu_custom_call.1} parent=1 // pred_region
      %47 = dma.done [#allocation3], 256
    $region21: #{tpu_custom_call.1} parent=1 // pred_fallthru
      _
    %48 = vsyncpa [#allocation3], 1

</llo_original>
